<compile_context>
chip_gen: v5e
topology: v5e:2x2
jax: 0.10.0
libtpu: 0.0.40
codegen_flags: <defaults>
</compile_context>

<pallas_src>
import functools

import jax
import jax.numpy as jnp
from jax.experimental import pallas as pl
from jax.experimental.pallas import tpu as pltpu

KH, KW = 17, 64        # conv kernel (height=17, width=64)
PAD = 8                # padding=(8, 0)
C_CONV = 5             # conv out_channels
N_CLS = 2              # fc2 out_features
P_ROWS = 13            # rows of the packed small-parameter block


def _cnn_kernel(T, x_ref, wc_ref, pp_ref, out_ref):
    # x_ref : (1, T+2*PAD, 64) bf16  -- padded input, one batch element
    # wc_ref: (KH, 64, 5)      bf16  -- conv weight, tap-major: wc[h, w, c]
    # pp_ref: (13, 5)          f32   -- [bconv; w1.T(5 rows); b1; w2 padded(5 rows); b2 padded]
    # out_ref: (1, 1, 2)       f32
    xb = x_ref[0]                                        # (T+16, 64) bf16

    # Conv2d(1->5, (17,64), pad=(8,0)) == sum of 17 time-shifted matmuls.
    acc = jnp.zeros((T, C_CONV), jnp.float32)
    for h in range(KH):                                  # static unroll, tap-wise
        acc += jnp.dot(xb[h:h + T, :], wc_ref[h],
                       preferred_element_type=jnp.float32)

    bconv = pp_ref[0:1, :]                               # (1, 5)
    relu = jnp.maximum(acc + bconv, 0.0)                 # nn.ReLU
    # AvgPool2d((decision_window, 1)): conv output height == T -> mean over time.
    pooled = jnp.mean(relu, axis=0, keepdims=True)       # (1, 5)

    w1t = pp_ref[1:6, :]                                 # (5, 5) == fc1.weight.T
    b1 = pp_ref[6:7, :]                                  # (1, 5)
    z = jnp.dot(pooled, w1t, preferred_element_type=jnp.float32) + b1
    h1 = pl.reciprocal(1.0 + jnp.exp(-z), approx=True)   # nn.Sigmoid (EUP path)

    w2p = pp_ref[7:12, :]                                # (5, 5): cols 0..1 = fc2.weight.T
    b2p = pp_ref[12:13, :]                               # (1, 5): cols 0..1 = fc2.bias
    y = jnp.dot(h1, w2p, preferred_element_type=jnp.float32) + b2p   # (1, 5)
    out_ref[...] = y[:, :N_CLS].reshape(1, 1, N_CLS)


def cnn_forward(x, params):
    """x: (B, T, 64) float32, T == decision_window. Returns (B, 2) float32."""
    B, T, W = x.shape
    assert W == KW, "last input dim must be 64 (conv kernel width)"
    wconv, bconv, w1, b1, w2, b2 = params

    # ---- wrapper glue (cheap, no im2col) ----
    xp = jnp.pad(x, ((0, 0), (PAD, PAD), (0, 0))).astype(jnp.bfloat16)   # (B, T+16, 64)
    # (5,1,17,64) -> (17,64,5) tap-major weight for the shifted-matmul conv.
    wc = jnp.transpose(wconv[:, 0], (1, 2, 0)).astype(jnp.bfloat16)

    # Pack the tiny parameters into one (13, 5) block: one DMA instead of five.
    pp = jnp.zeros((P_ROWS, C_CONV), jnp.float32)
    pp = pp.at[0].set(bconv)                 # conv bias
    pp = pp.at[1:6].set(w1.T)                # fc1 weight (as RHS)
    pp = pp.at[6].set(b1)                    # fc1 bias
    pp = pp.at[7:12, :N_CLS].set(w2.T)       # fc2 weight (as RHS), zero-padded cols
    pp = pp.at[12, :N_CLS].set(b2)           # fc2 bias, zero-padded cols

    kernel = functools.partial(_cnn_kernel, T)
    out = pl.pallas_call(
        kernel,
        out_shape=jax.ShapeDtypeStruct((B, 1, N_CLS), jnp.float32),
        grid=(B,),
        in_specs=[
            pl.BlockSpec((1, T + 2 * PAD, KW), lambda b: (b, 0, 0)),
            pl.BlockSpec((KH, KW, C_CONV), lambda b: (0, 0, 0)),
            pl.BlockSpec((P_ROWS, C_CONV), lambda b: (0, 0)),
        ],
        out_specs=pl.BlockSpec((1, 1, N_CLS), lambda b: (b, 0, 0)),
        compiler_params=pltpu.CompilerParams(
            dimension_semantics=("parallel",),          # megacore on v7x
            vmem_limit_bytes=32 * 1024 * 1024,          # tiny blocks; safe on all gens
        ),
    )(xp, wc, pp)
    return out.reshape(B, N_CLS)


def init_params(key):
    """Deterministic PyTorch-default-style (uniform +-1/sqrt(fan_in)) init."""
    ks = jax.random.split(key, 6)
    bnd_c = 1.0 / float(jnp.sqrt(1.0 * KH * KW))
    wconv = jax.random.uniform(ks[0], (C_CONV, 1, KH, KW), jnp.float32, -bnd_c, bnd_c)
    bconv = jax.random.uniform(ks[1], (C_CONV,), jnp.float32, -bnd_c, bnd_c)
    bnd1 = 1.0 / float(jnp.sqrt(5.0))
    w1 = jax.random.uniform(ks[2], (5, 5), jnp.float32, -bnd1, bnd1)
    b1 = jax.random.uniform(ks[3], (5,), jnp.float32, -bnd1, bnd1)
    w2 = jax.random.uniform(ks[4], (2, 5), jnp.float32, -bnd1, bnd1)
    b2 = jax.random.uniform(ks[5], (2,), jnp.float32, -bnd1, bnd1)
    return wconv, bconv, w1, b1, w2, b2


def reference(x, params):
    """Pure-JAX f32 reference replicating the PyTorch forward exactly."""
    wconv, bconv, w1, b1, w2, b2 = params
    xi = x[:, None, :, :]                                    # unsqueeze -> NCHW
    conv = jax.lax.conv_general_dilated(
        xi, wconv, window_strides=(1, 1), padding=((PAD, PAD), (0, 0)),
        dimension_numbers=("NCHW", "OIHW", "NCHW"))
    conv = conv + bconv[None, :, None, None]
    relu = jnp.maximum(conv, 0.0)
    pooled = jnp.mean(relu, axis=(2, 3))                     # AvgPool2d((T,1)), H==T
    h = pooled @ w1.T + b1
    h = jax.nn.sigmoid(h)
    return h @ w2.T + b2


if __name__ == "__main__":
    key = jax.random.PRNGKey(0)
    kx, kp = jax.random.split(key)
    B, decision_window = 2, 16                               # small synthetic shapes
    x = jax.random.normal(kx, (B, decision_window, KW), jnp.float32)
    params = init_params(kp)

    out = cnn_forward(x, params)
    out = jax.block_until_ready(out)

    ref = reference(x, params)
    assert out.shape == (B, N_CLS)
    assert jnp.allclose(out, ref, atol=1e-2, rtol=1e-2), (out, ref)
    print("KERNEL_OK")
</pallas_src>

<mosaic_0001>
module attributes {stable_mosaic.version = 11 : i64} {
  func.func @_cnn_kernel(%arg0: i32, %arg1: memref<1x32x64xbf16, #tpu.memory_space<vmem>>, %arg2: memref<17x64x5xbf16, #tpu.memory_space<vmem>>, %arg3: memref<13x5xf32, #tpu.memory_space<vmem>>, %arg4: memref<1x1x2xf32, #tpu.memory_space<vmem>>) attributes {dimension_semantics = [#tpu.dimension_semantics<parallel>], iteration_bounds = array<i64: 2>, scalar_prefetch = 0 : i64, scratch_operands = 0 : i64, tpu.core_type = #tpu.core_type<tc>, window_params = [{transform_indices = @transform_0, window_bounds = array<i64: 1, 32, 64>}, {pipeline_mode = #tpu.pipeline_mode<synchronous>, transform_indices = @transform_1, window_bounds = array<i64: 17, 64, 5>}, {pipeline_mode = #tpu.pipeline_mode<synchronous>, transform_indices = @transform_2, window_bounds = array<i64: 13, 5>}, {transform_indices = @transform_3, window_bounds = array<i64: 1, 1, 2>}]} {
    %c0 = arith.constant 0 : index
    %c0_0 = arith.constant 0 : index
    %c0_1 = arith.constant 0 : index
    %0 = vector.load %arg1[%c0, %c0_0, %c0_1] : memref<1x32x64xbf16, #tpu.memory_space<vmem>>, vector<1x32x64xbf16>
    %1 = vector.shape_cast %0 : vector<1x32x64xbf16> to vector<32x64xbf16>
    %cst = arith.constant 0.000000e+00 : f32
    %2 = vector.broadcast %cst : f32 to vector<16x5xf32>
    %3 = vector.extract_strided_slice %1 {offsets = [0, 0], sizes = [16, 64], strides = [1, 1]} : vector<32x64xbf16> to vector<16x64xbf16>
    %c0_2 = arith.constant 0 : index
    %c0_3 = arith.constant 0 : index
    %c0_4 = arith.constant 0 : index
    %4 = vector.load %arg2[%c0_2, %c0_3, %c0_4] : memref<17x64x5xbf16, #tpu.memory_space<vmem>>, vector<1x64x5xbf16>
    %5 = vector.shape_cast %4 : vector<1x64x5xbf16> to vector<64x5xbf16>
    %cst_5 = arith.constant dense<0.000000e+00> : vector<16x5xf32>
    %6 = tpu.matmul %3, %5, %cst_5 {dimension_numbers = #tpu.dot_dimension_numbers<[1], [0], [0], [1], [0, 0, 1, 1], [], []>} : vector<16x64xbf16>, vector<64x5xbf16>, vector<16x5xf32> -> vector<16x5xf32>
    %7 = arith.addf %2, %6 : vector<16x5xf32>
    %8 = vector.extract_strided_slice %1 {offsets = [1, 0], sizes = [16, 64], strides = [1, 1]} : vector<32x64xbf16> to vector<16x64xbf16>
    %c1 = arith.constant 1 : index
    %c0_6 = arith.constant 0 : index
    %c0_7 = arith.constant 0 : index
    %9 = vector.load %arg2[%c1, %c0_6, %c0_7] : memref<17x64x5xbf16, #tpu.memory_space<vmem>>, vector<1x64x5xbf16>
    %10 = vector.shape_cast %9 : vector<1x64x5xbf16> to vector<64x5xbf16>
    %cst_8 = arith.constant dense<0.000000e+00> : vector<16x5xf32>
    %11 = tpu.matmul %8, %10, %cst_8 {dimension_numbers = #tpu.dot_dimension_numbers<[1], [0], [0], [1], [0, 0, 1, 1], [], []>} : vector<16x64xbf16>, vector<64x5xbf16>, vector<16x5xf32> -> vector<16x5xf32>
    %12 = arith.addf %7, %11 : vector<16x5xf32>
    %13 = vector.extract_strided_slice %1 {offsets = [2, 0], sizes = [16, 64], strides = [1, 1]} : vector<32x64xbf16> to vector<16x64xbf16>
    %c2 = arith.constant 2 : index
    %c0_9 = arith.constant 0 : index
    %c0_10 = arith.constant 0 : index
    %14 = vector.load %arg2[%c2, %c0_9, %c0_10] : memref<17x64x5xbf16, #tpu.memory_space<vmem>>, vector<1x64x5xbf16>
    %15 = vector.shape_cast %14 : vector<1x64x5xbf16> to vector<64x5xbf16>
    %cst_11 = arith.constant dense<0.000000e+00> : vector<16x5xf32>
    %16 = tpu.matmul %13, %15, %cst_11 {dimension_numbers = #tpu.dot_dimension_numbers<[1], [0], [0], [1], [0, 0, 1, 1], [], []>} : vector<16x64xbf16>, vector<64x5xbf16>, vector<16x5xf32> -> vector<16x5xf32>
    %17 = arith.addf %12, %16 : vector<16x5xf32>
    %18 = vector.extract_strided_slice %1 {offsets = [3, 0], sizes = [16, 64], strides = [1, 1]} : vector<32x64xbf16> to vector<16x64xbf16>
    %c3 = arith.constant 3 : index
    %c0_12 = arith.constant 0 : index
    %c0_13 = arith.constant 0 : index
    %19 = vector.load %arg2[%c3, %c0_12, %c0_13] : memref<17x64x5xbf16, #tpu.memory_space<vmem>>, vector<1x64x5xbf16>
    %20 = vector.shape_cast %19 : vector<1x64x5xbf16> to vector<64x5xbf16>
    %cst_14 = arith.constant dense<0.000000e+00> : vector<16x5xf32>
    %21 = tpu.matmul %18, %20, %cst_14 {dimension_numbers = #tpu.dot_dimension_numbers<[1], [0], [0], [1], [0, 0, 1, 1], [], []>} : vector<16x64xbf16>, vector<64x5xbf16>, vector<16x5xf32> -> vector<16x5xf32>
    %22 = arith.addf %17, %21 : vector<16x5xf32>
    %23 = vector.extract_strided_slice %1 {offsets = [4, 0], sizes = [16, 64], strides = [1, 1]} : vector<32x64xbf16> to vector<16x64xbf16>
    %c4 = arith.constant 4 : index
    %c0_15 = arith.constant 0 : index
    %c0_16 = arith.constant 0 : index
    %24 = vector.load %arg2[%c4, %c0_15, %c0_16] : memref<17x64x5xbf16, #tpu.memory_space<vmem>>, vector<1x64x5xbf16>
    %25 = vector.shape_cast %24 : vector<1x64x5xbf16> to vector<64x5xbf16>
    %cst_17 = arith.constant dense<0.000000e+00> : vector<16x5xf32>
    %26 = tpu.matmul %23, %25, %cst_17 {dimension_numbers = #tpu.dot_dimension_numbers<[1], [0], [0], [1], [0, 0, 1, 1], [], []>} : vector<16x64xbf16>, vector<64x5xbf16>, vector<16x5xf32> -> vector<16x5xf32>
    %27 = arith.addf %22, %26 : vector<16x5xf32>
    %28 = vector.extract_strided_slice %1 {offsets = [5, 0], sizes = [16, 64], strides = [1, 1]} : vector<32x64xbf16> to vector<16x64xbf16>
    %c5 = arith.constant 5 : index
    %c0_18 = arith.constant 0 : index
    %c0_19 = arith.constant 0 : index
    %29 = vector.load %arg2[%c5, %c0_18, %c0_19] : memref<17x64x5xbf16, #tpu.memory_space<vmem>>, vector<1x64x5xbf16>
    %30 = vector.shape_cast %29 : vector<1x64x5xbf16> to vector<64x5xbf16>
    %cst_20 = arith.constant dense<0.000000e+00> : vector<16x5xf32>
    %31 = tpu.matmul %28, %30, %cst_20 {dimension_numbers = #tpu.dot_dimension_numbers<[1], [0], [0], [1], [0, 0, 1, 1], [], []>} : vector<16x64xbf16>, vector<64x5xbf16>, vector<16x5xf32> -> vector<16x5xf32>
    %32 = arith.addf %27, %31 : vector<16x5xf32>
    %33 = vector.extract_strided_slice %1 {offsets = [6, 0], sizes = [16, 64], strides = [1, 1]} : vector<32x64xbf16> to vector<16x64xbf16>
    %c6 = arith.constant 6 : index
    %c0_21 = arith.constant 0 : index
    %c0_22 = arith.constant 0 : index
    %34 = vector.load %arg2[%c6, %c0_21, %c0_22] : memref<17x64x5xbf16, #tpu.memory_space<vmem>>, vector<1x64x5xbf16>
    %35 = vector.shape_cast %34 : vector<1x64x5xbf16> to vector<64x5xbf16>
    %cst_23 = arith.constant dense<0.000000e+00> : vector<16x5xf32>
    %36 = tpu.matmul %33, %35, %cst_23 {dimension_numbers = #tpu.dot_dimension_numbers<[1], [0], [0], [1], [0, 0, 1, 1], [], []>} : vector<16x64xbf16>, vector<64x5xbf16>, vector<16x5xf32> -> vector<16x5xf32>
    %37 = arith.addf %32, %36 : vector<16x5xf32>
    %38 = vector.extract_strided_slice %1 {offsets = [7, 0], sizes = [16, 64], strides = [1, 1]} : vector<32x64xbf16> to vector<16x64xbf16>
    %c7 = arith.constant 7 : index
    %c0_24 = arith.constant 0 : index
    %c0_25 = arith.constant 0 : index
    %39 = vector.load %arg2[%c7, %c0_24, %c0_25] : memref<17x64x5xbf16, #tpu.memory_space<vmem>>, vector<1x64x5xbf16>
    %40 = vector.shape_cast %39 : vector<1x64x5xbf16> to vector<64x5xbf16>
    %cst_26 = arith.constant dense<0.000000e+00> : vector<16x5xf32>
    %41 = tpu.matmul %38, %40, %cst_26 {dimension_numbers = #tpu.dot_dimension_numbers<[1], [0], [0], [1], [0, 0, 1, 1], [], []>} : vector<16x64xbf16>, vector<64x5xbf16>, vector<16x5xf32> -> vector<16x5xf32>
    %42 = arith.addf %37, %41 : vector<16x5xf32>
    %43 = vector.extract_strided_slice %1 {offsets = [8, 0], sizes = [16, 64], strides = [1, 1]} : vector<32x64xbf16> to vector<16x64xbf16>
    %c8 = arith.constant 8 : index
    %c0_27 = arith.constant 0 : index
    %c0_28 = arith.constant 0 : index
    %44 = vector.load %arg2[%c8, %c0_27, %c0_28] : memref<17x64x5xbf16, #tpu.memory_space<vmem>>, vector<1x64x5xbf16>
    %45 = vector.shape_cast %44 : vector<1x64x5xbf16> to vector<64x5xbf16>
    %cst_29 = arith.constant dense<0.000000e+00> : vector<16x5xf32>
    %46 = tpu.matmul %43, %45, %cst_29 {dimension_numbers = #tpu.dot_dimension_numbers<[1], [0], [0], [1], [0, 0, 1, 1], [], []>} : vector<16x64xbf16>, vector<64x5xbf16>, vector<16x5xf32> -> vector<16x5xf32>
    %47 = arith.addf %42, %46 : vector<16x5xf32>
    %48 = vector.extract_strided_slice %1 {offsets = [9, 0], sizes = [16, 64], strides = [1, 1]} : vector<32x64xbf16> to vector<16x64xbf16>
    %c9 = arith.constant 9 : index
    %c0_30 = arith.constant 0 : index
    %c0_31 = arith.constant 0 : index
    %49 = vector.load %arg2[%c9, %c0_30, %c0_31] : memref<17x64x5xbf16, #tpu.memory_space<vmem>>, vector<1x64x5xbf16>
    %50 = vector.shape_cast %49 : vector<1x64x5xbf16> to vector<64x5xbf16>
    %cst_32 = arith.constant dense<0.000000e+00> : vector<16x5xf32>
    %51 = tpu.matmul %48, %50, %cst_32 {dimension_numbers = #tpu.dot_dimension_numbers<[1], [0], [0], [1], [0, 0, 1, 1], [], []>} : vector<16x64xbf16>, vector<64x5xbf16>, vector<16x5xf32> -> vector<16x5xf32>
    %52 = arith.addf %47, %51 : vector<16x5xf32>
    %53 = vector.extract_strided_slice %1 {offsets = [10, 0], sizes = [16, 64], strides = [1, 1]} : vector<32x64xbf16> to vector<16x64xbf16>
    %c10 = arith.constant 10 : index
    %c0_33 = arith.constant 0 : index
    %c0_34 = arith.constant 0 : index
    %54 = vector.load %arg2[%c10, %c0_33, %c0_34] : memref<17x64x5xbf16, #tpu.memory_space<vmem>>, vector<1x64x5xbf16>
    %55 = vector.shape_cast %54 : vector<1x64x5xbf16> to vector<64x5xbf16>
    %cst_35 = arith.constant dense<0.000000e+00> : vector<16x5xf32>
    %56 = tpu.matmul %53, %55, %cst_35 {dimension_numbers = #tpu.dot_dimension_numbers<[1], [0], [0], [1], [0, 0, 1, 1], [], []>} : vector<16x64xbf16>, vector<64x5xbf16>, vector<16x5xf32> -> vector<16x5xf32>
    %57 = arith.addf %52, %56 : vector<16x5xf32>
    %58 = vector.extract_strided_slice %1 {offsets = [11, 0], sizes = [16, 64], strides = [1, 1]} : vector<32x64xbf16> to vector<16x64xbf16>
    %c11 = arith.constant 11 : index
    %c0_36 = arith.constant 0 : index
    %c0_37 = arith.constant 0 : index
    %59 = vector.load %arg2[%c11, %c0_36, %c0_37] : memref<17x64x5xbf16, #tpu.memory_space<vmem>>, vector<1x64x5xbf16>
    %60 = vector.shape_cast %59 : vector<1x64x5xbf16> to vector<64x5xbf16>
    %cst_38 = arith.constant dense<0.000000e+00> : vector<16x5xf32>
    %61 = tpu.matmul %58, %60, %cst_38 {dimension_numbers = #tpu.dot_dimension_numbers<[1], [0], [0], [1], [0, 0, 1, 1], [], []>} : vector<16x64xbf16>, vector<64x5xbf16>, vector<16x5xf32> -> vector<16x5xf32>
    %62 = arith.addf %57, %61 : vector<16x5xf32>
    %63 = vector.extract_strided_slice %1 {offsets = [12, 0], sizes = [16, 64], strides = [1, 1]} : vector<32x64xbf16> to vector<16x64xbf16>
    %c12 = arith.constant 12 : index
    %c0_39 = arith.constant 0 : index
    %c0_40 = arith.constant 0 : index
    %64 = vector.load %arg2[%c12, %c0_39, %c0_40] : memref<17x64x5xbf16, #tpu.memory_space<vmem>>, vector<1x64x5xbf16>
    %65 = vector.shape_cast %64 : vector<1x64x5xbf16> to vector<64x5xbf16>
    %cst_41 = arith.constant dense<0.000000e+00> : vector<16x5xf32>
    %66 = tpu.matmul %63, %65, %cst_41 {dimension_numbers = #tpu.dot_dimension_numbers<[1], [0], [0], [1], [0, 0, 1, 1], [], []>} : vector<16x64xbf16>, vector<64x5xbf16>, vector<16x5xf32> -> vector<16x5xf32>
    %67 = arith.addf %62, %66 : vector<16x5xf32>
    %68 = vector.extract_strided_slice %1 {offsets = [13, 0], sizes = [16, 64], strides = [1, 1]} : vector<32x64xbf16> to vector<16x64xbf16>
    %c13 = arith.constant 13 : index
    %c0_42 = arith.constant 0 : index
    %c0_43 = arith.constant 0 : index
    %69 = vector.load %arg2[%c13, %c0_42, %c0_43] : memref<17x64x5xbf16, #tpu.memory_space<vmem>>, vector<1x64x5xbf16>
    %70 = vector.shape_cast %69 : vector<1x64x5xbf16> to vector<64x5xbf16>
    %cst_44 = arith.constant dense<0.000000e+00> : vector<16x5xf32>
    %71 = tpu.matmul %68, %70, %cst_44 {dimension_numbers = #tpu.dot_dimension_numbers<[1], [0], [0], [1], [0, 0, 1, 1], [], []>} : vector<16x64xbf16>, vector<64x5xbf16>, vector<16x5xf32> -> vector<16x5xf32>
    %72 = arith.addf %67, %71 : vector<16x5xf32>
    %73 = vector.extract_strided_slice %1 {offsets = [14, 0], sizes = [16, 64], strides = [1, 1]} : vector<32x64xbf16> to vector<16x64xbf16>
    %c14 = arith.constant 14 : index
    %c0_45 = arith.constant 0 : index
    %c0_46 = arith.constant 0 : index
    %74 = vector.load %arg2[%c14, %c0_45, %c0_46] : memref<17x64x5xbf16, #tpu.memory_space<vmem>>, vector<1x64x5xbf16>
    %75 = vector.shape_cast %74 : vector<1x64x5xbf16> to vector<64x5xbf16>
    %cst_47 = arith.constant dense<0.000000e+00> : vector<16x5xf32>
    %76 = tpu.matmul %73, %75, %cst_47 {dimension_numbers = #tpu.dot_dimension_numbers<[1], [0], [0], [1], [0, 0, 1, 1], [], []>} : vector<16x64xbf16>, vector<64x5xbf16>, vector<16x5xf32> -> vector<16x5xf32>
    %77 = arith.addf %72, %76 : vector<16x5xf32>
    %78 = vector.extract_strided_slice %1 {offsets = [15, 0], sizes = [16, 64], strides = [1, 1]} : vector<32x64xbf16> to vector<16x64xbf16>
    %c15 = arith.constant 15 : index
    %c0_48 = arith.constant 0 : index
    %c0_49 = arith.constant 0 : index
    %79 = vector.load %arg2[%c15, %c0_48, %c0_49] : memref<17x64x5xbf16, #tpu.memory_space<vmem>>, vector<1x64x5xbf16>
    %80 = vector.shape_cast %79 : vector<1x64x5xbf16> to vector<64x5xbf16>
    %cst_50 = arith.constant dense<0.000000e+00> : vector<16x5xf32>
    %81 = tpu.matmul %78, %80, %cst_50 {dimension_numbers = #tpu.dot_dimension_numbers<[1], [0], [0], [1], [0, 0, 1, 1], [], []>} : vector<16x64xbf16>, vector<64x5xbf16>, vector<16x5xf32> -> vector<16x5xf32>
    %82 = arith.addf %77, %81 : vector<16x5xf32>
    %83 = vector.extract_strided_slice %1 {offsets = [16, 0], sizes = [16, 64], strides = [1, 1]} : vector<32x64xbf16> to vector<16x64xbf16>
    %c16 = arith.constant 16 : index
    %c0_51 = arith.constant 0 : index
    %c0_52 = arith.constant 0 : index
    %84 = vector.load %arg2[%c16, %c0_51, %c0_52] : memref<17x64x5xbf16, #tpu.memory_space<vmem>>, vector<1x64x5xbf16>
    %85 = vector.shape_cast %84 : vector<1x64x5xbf16> to vector<64x5xbf16>
    %cst_53 = arith.constant dense<0.000000e+00> : vector<16x5xf32>
    %86 = tpu.matmul %83, %85, %cst_53 {dimension_numbers = #tpu.dot_dimension_numbers<[1], [0], [0], [1], [0, 0, 1, 1], [], []>} : vector<16x64xbf16>, vector<64x5xbf16>, vector<16x5xf32> -> vector<16x5xf32>
    %87 = arith.addf %82, %86 : vector<16x5xf32>
    %c0_54 = arith.constant 0 : index
    %c0_55 = arith.constant 0 : index
    %88 = vector.load %arg3[%c0_54, %c0_55] : memref<13x5xf32, #tpu.memory_space<vmem>>, vector<1x5xf32>
    %89 = vector.broadcast %88 : vector<1x5xf32> to vector<16x5xf32>
    %90 = arith.addf %87, %89 : vector<16x5xf32>
    %cst_56 = arith.constant 0.000000e+00 : f32
    %91 = vector.broadcast %cst_56 : f32 to vector<16x5xf32>
    %92 = arith.maximumf %90, %91 : vector<16x5xf32>
    %cst_57 = arith.constant dense<0.000000e+00> : vector<5xf32>
    %93 = vector.multi_reduction <add>, %92, %cst_57 [0] : vector<16x5xf32> to vector<5xf32>
    %94 = vector.shape_cast %93 : vector<5xf32> to vector<1x5xf32>
    %cst_58 = arith.constant 1.600000e+01 : f32
    %95 = vector.broadcast %cst_58 : f32 to vector<1x5xf32>
    %96 = arith.divf %94, %95 : vector<1x5xf32>
    %c1_59 = arith.constant 1 : index
    %c0_60 = arith.constant 0 : index
    %97 = vector.load %arg3[%c1_59, %c0_60] : memref<13x5xf32, #tpu.memory_space<vmem>>, vector<5x5xf32>
    %c6_61 = arith.constant 6 : index
    %c0_62 = arith.constant 0 : index
    %98 = vector.load %arg3[%c6_61, %c0_62] : memref<13x5xf32, #tpu.memory_space<vmem>>, vector<1x5xf32>
    %cst_63 = arith.constant dense<0.000000e+00> : vector<1x5xf32>
    %99 = tpu.matmul %96, %97, %cst_63 {dimension_numbers = #tpu.dot_dimension_numbers<[1], [0], [0], [1], [0, 0, 1, 1], [], []>} : vector<1x5xf32>, vector<5x5xf32>, vector<1x5xf32> -> vector<1x5xf32>
    %100 = arith.addf %99, %98 : vector<1x5xf32>
    %cst_64 = arith.constant 0.000000e+00 : f32
    %101 = vector.broadcast %cst_64 : f32 to vector<1x5xf32>
    %102 = arith.subf %101, %100 : vector<1x5xf32>
    %103 = math.exp %102 : vector<1x5xf32>
    %cst_65 = arith.constant 1.000000e+00 : f32
    %104 = vector.broadcast %cst_65 : f32 to vector<1x5xf32>
    %105 = arith.addf %104, %103 : vector<1x5xf32>
    %106 = tpu.reciprocal %105 {approx = true} : vector<1x5xf32> -> vector<1x5xf32>
    %c7_66 = arith.constant 7 : index
    %c0_67 = arith.constant 0 : index
    %107 = vector.load %arg3[%c7_66, %c0_67] : memref<13x5xf32, #tpu.memory_space<vmem>>, vector<5x5xf32>
    %c12_68 = arith.constant 12 : index
    %c0_69 = arith.constant 0 : index
    %108 = vector.load %arg3[%c12_68, %c0_69] : memref<13x5xf32, #tpu.memory_space<vmem>>, vector<1x5xf32>
    %cst_70 = arith.constant dense<0.000000e+00> : vector<1x5xf32>
    %109 = tpu.matmul %106, %107, %cst_70 {dimension_numbers = #tpu.dot_dimension_numbers<[1], [0], [0], [1], [0, 0, 1, 1], [], []>} : vector<1x5xf32>, vector<5x5xf32>, vector<1x5xf32> -> vector<1x5xf32>
    %110 = arith.addf %109, %108 : vector<1x5xf32>
    %111 = vector.extract_strided_slice %110 {offsets = [0, 0], sizes = [1, 2], strides = [1, 1]} : vector<1x5xf32> to vector<1x2xf32>
    %112 = vector.shape_cast %111 : vector<1x2xf32> to vector<1x1x2xf32>
    %c0_71 = arith.constant 0 : index
    %c0_72 = arith.constant 0 : index
    %c0_73 = arith.constant 0 : index
    %113 = vector.load %arg4[%c0_71, %c0_72, %c0_73] : memref<1x1x2xf32, #tpu.memory_space<vmem>>, vector<1x1x2xf32>
    tpu.vector_store %arg4[%c0_71, %c0_72, %c0_73], %112 {strides = array<i32>} : memref<1x1x2xf32, #tpu.memory_space<vmem>>, vector<1x1x2xf32>,
    return
  }
  func.func @transform_0(%arg0: i32) -> (i32, i32, i32) {
    %c0_i32 = arith.constant 0 : i32
    %c0_i32_0 = arith.constant 0 : i32
    %c0_i32_1 = arith.constant 0 : i32
    return %arg0, %c0_i32, %c0_i32_0 : i32, i32, i32
  }
  func.func @transform_1(%arg0: i32) -> (i32, i32, i32) {
    %c0_i32 = arith.constant 0 : i32
    %c0_i32_0 = arith.constant 0 : i32
    %c0_i32_1 = arith.constant 0 : i32
    %c0_i32_2 = arith.constant 0 : i32
    return %c0_i32, %c0_i32_0, %c0_i32_1 : i32, i32, i32
  }
  func.func @transform_2(%arg0: i32) -> (i32, i32) {
    %c0_i32 = arith.constant 0 : i32
    %c0_i32_0 = arith.constant 0 : i32
    %c0_i32_1 = arith.constant 0 : i32
    return %c0_i32, %c0_i32_0 : i32, i32
  }
  func.func @transform_3(%arg0: i32) -> (i32, i32, i32) {
    %c0_i32 = arith.constant 0 : i32
    %c0_i32_0 = arith.constant 0 : i32
    %c0_i32_1 = arith.constant 0 : i32
    return %arg0, %c0_i32, %c0_i32_0 : i32, i32, i32
  }
}

</mosaic_0001>

<llo_original>
// kernel: tpu_custom_call.1
$region0: #{tpu_custom_call.1}
  #allocation0 [shape = 'u32[]', space=smem, size = 0x4, offset = 0x4, fixed_abs, tag = 'smem constant byte address 0x4 - core index']
  #allocation1 [shape = 'u32[72,128]{1,0:T(1,128)}', space=vmem, size = 0x9000, scoped, tag = 'internal scratch']
  %s0 = inlined_call_operand.vmem [shape: bf16[2,32,64], index: 0, kind: input, shape index: {}]
  %s1 = inlined_call_operand.vmem [shape: bf16[17,64,5], index: 1, kind: input, shape index: {}]
  %s2 = inlined_call_operand.vmem [shape: f32[13,5], index: 2, kind: input, shape index: {}]
  %s3 = inlined_call_operand.hbm [shape: f32[2,1,2], index: 3, kind: output, shape index: {}]
  %s4 = sld [smem:[#allocation0]]
  $region45: #{tpu_custom_call.1} parent=0
    _
  %s6 = ssub.s32 1, %s4
  %s7 = scalar_select 0, %s6, %s4
  $region1: #{tpu_custom_call.1} parent=0
    #allocation2 [shape = 'u8[1024]{0}', space=vmem, size = 0x400, scoped, tag = 'output window, operand 0']
    #allocation3 [shape = 's32[2]{0}', space=sflag, size = 0x8, scoped, tag = 'scoped memory for tpu_custom_call.1']
    %8 = vsyncpa [#allocation3], 0
    %s9 = scalar_lea.sflag [#allocation3], 1
    %10 = vsyncpa %s9, 0
    loop: start=0, step=1, limit=4
    $region2: #{tpu_custom_call.1} parent=1 // loop_pre_header
      _
    $region3: #{tpu_custom_call.1} parent=1 // loop_header
      %s12 = sphi 0, %s16
      %p13 = scmp.ge.s32.totalorder %s12, 4
      %s22 = sphi 0, %s24
      %s25 = sphi 0, %s22
      %s26 = sphi 0, %s25
      %s42 = sphi 0, %s26
      %s46 = sphi 0, %s46
      %s48 = sphi 0, %s46
      %s49 = sphi 0, %s48
      %s63 = sphi 0, %s49
      %s67 = sphi 0, %s67
      %s69 = sphi 0, %s67
      %s70 = sphi 0, %s69
      %s84 = sphi 0, %s70
      %s90 = sphi 0, %s92
      %s93 = sphi 0, %s90
      %s94 = sphi 0, %s93
      %s110 = sphi 0, %s94
    $region4: #{tpu_custom_call.1} parent=1 // loop_header_branch
      %15 = sbr.rel (%p13) target = $region8
    $region5: #{tpu_custom_call.1} parent=1 // loop_body
      %s17 = ssub.s32 %s12, 1
      %s18 = ssub.s32 %s12, 2
      %s19 = sadd.s32 %s12, 1
      %s20 = ssub.s32 %s12, %s19
      %p21 = scmp.eq.s32.totalorder %s20, 0
      %s23 = sadd.s32 %s22, 1
      %s24 = scalar_select %p21, %s22, %s23
      %p27 = pneg %p21
      %p28 = scmp.eq.s32.totalorder %s12, 1
      %p29 = por %p27, %p28
      %p30 = scmp.ne.s32.totalorder %s22, %s25
      %p31 = scmp.eq.s32.totalorder %s12, 0
      %p32 = por %p30, %p31
      %p33 = scmp.ne.s32.totalorder %s22, %s25
      %p34 = scmp.eq.s32.totalorder %s17, 1
      %p35 = por %p33, %p34
      %p36 = scmp.ne.s32.totalorder %s25, %s26
      %p37 = scmp.eq.s32.totalorder %s17, 0
      %p38 = por %p36, %p37
      %p39 = scmp.ne.s32.totalorder %s25, %s26
      %p40 = scmp.eq.s32.totalorder %s18, 1
      %p41 = por %p39, %p40
      %p43 = scmp.ne.s32.totalorder %s26, %s42
      %p44 = scmp.eq.s32.totalorder %s18, 0
      %p45 = por %p43, %p44
      %s47 = sadd.s32 %s46, 1
      %p50 = scmp.eq.s32.totalorder %s12, 1
      %p51 = scmp.ne.s32.totalorder %s46, %s48
      %p52 = scmp.eq.s32.totalorder %s12, 0
      %p53 = por %p51, %p52
      %p54 = scmp.ne.s32.totalorder %s46, %s48
      %p55 = scmp.eq.s32.totalorder %s17, 1
      %p56 = por %p54, %p55
      %p57 = scmp.ne.s32.totalorder %s48, %s49
      %p58 = scmp.eq.s32.totalorder %s17, 0
      %p59 = por %p57, %p58
      %p60 = scmp.ne.s32.totalorder %s48, %s49
      %p61 = scmp.eq.s32.totalorder %s18, 1
      %p62 = por %p60, %p61
      %p64 = scmp.ne.s32.totalorder %s49, %s63
      %p65 = scmp.eq.s32.totalorder %s18, 0
      %p66 = por %p64, %p65
      %s68 = sadd.s32 %s67, 1
      %p71 = scmp.eq.s32.totalorder %s12, 1
      %p72 = scmp.ne.s32.totalorder %s67, %s69
      %p73 = scmp.eq.s32.totalorder %s12, 0
      %p74 = por %p72, %p73
      %p75 = scmp.ne.s32.totalorder %s67, %s69
      %p76 = scmp.eq.s32.totalorder %s17, 1
      %p77 = por %p75, %p76
      %p78 = scmp.ne.s32.totalorder %s69, %s70
      %p79 = scmp.eq.s32.totalorder %s17, 0
      %p80 = por %p78, %p79
      %p81 = scmp.ne.s32.totalorder %s69, %s70
      %p82 = scmp.eq.s32.totalorder %s18, 1
      %p83 = por %p81, %p82
      %p85 = scmp.ne.s32.totalorder %s70, %s84
      %p86 = scmp.eq.s32.totalorder %s18, 0
      %p87 = por %p85, %p86
      %s88 = ssub.s32 %s12, %s19
      %p89 = scmp.eq.s32.totalorder %s88, 0
      %s91 = sadd.s32 %s90, 1
      %s92 = scalar_select %p89, %s90, %s91
      %p95 = pneg %p89
      %p96 = scmp.eq.s32.totalorder %s12, 1
      %p97 = por %p95, %p96
      %p98 = scmp.ne.s32.totalorder %s90, %s93
      %p99 = scmp.eq.s32.totalorder %s12, 0
      %p100 = por %p98, %p99
      %p101 = scmp.ne.s32.totalorder %s90, %s93
      %p102 = scmp.eq.s32.totalorder %s17, 1
      %p103 = por %p101, %p102
      %p104 = scmp.ne.s32.totalorder %s93, %s94
      %p105 = scmp.eq.s32.totalorder %s17, 0
      %p106 = por %p104, %p105
      %p107 = scmp.ne.s32.totalorder %s93, %s94
      %p108 = scmp.eq.s32.totalorder %s18, 1
      %p109 = por %p107, %p108
      %p111 = scmp.ne.s32.totalorder %s94, %s110
      %p112 = scmp.eq.s32.totalorder %s18, 0
      %p113 = por %p111, %p112
      %p114 = scmp.le.s32.totalorder 1, %s12
      %p115 = scmp.lt.s32.totalorder %s12, 3
      %p116 = pnand %p114, %p115
      %p117 = pneg %p116
      // Predicated region
      $region9: #{tpu_custom_call.1} parent=5 // pred_check
        _
      $region10: #{tpu_custom_call.1} parent=5 // pred_check_branch
        %119 = sbr.rel (%p116) target = $region12
      $region11: #{tpu_custom_call.1} parent=5 // pred_region
        %s120 = ssub.s32 %s12, 1
        // Predicated region
        $region13: #{tpu_custom_call.1} parent=11 // pred_check
          %p121 = pneg %p59
        $region14: #{tpu_custom_call.1} parent=11 // pred_check_branch
          %123 = sbr.rel (%p121) target = $region16
        $region15: #{tpu_custom_call.1} parent=11 // pred_region
          _
        $region16: #{tpu_custom_call.1} parent=11 // pred_fallthru
          _
        // Predicated region
        $region17: #{tpu_custom_call.1} parent=11 // pred_check
          %p124 = pneg %p80
        $region18: #{tpu_custom_call.1} parent=11 // pred_check_branch
          %126 = sbr.rel (%p124) target = $region20
        $region19: #{tpu_custom_call.1} parent=11 // pred_region
          _
        $region20: #{tpu_custom_call.1} parent=11 // pred_fallthru
          _
      $region12: #{tpu_custom_call.1} parent=5 // pred_fallthru
        _
      %p127 = scmp.lt.s32.totalorder %s12, 2
      // Predicated region
      $region21: #{tpu_custom_call.1} parent=5 // pred_check
        %p128 = pneg %p127
      $region22: #{tpu_custom_call.1} parent=5 // pred_check_branch
        %130 = sbr.rel (%p128) target = $region24
      $region23: #{tpu_custom_call.1} parent=5 // pred_region
        // Predicated region
        $region25: #{tpu_custom_call.1} parent=23 // pred_check
          %p131 = pneg %p32
        $region26: #{tpu_custom_call.1} parent=23 // pred_check_branch
          %133 = sbr.rel (%p131) target = $region28
        $region27: #{tpu_custom_call.1} parent=23 // pred_region
          %p134 = scmp.lt.s32.totalorder %s12, 1
          %s135 = scalar_select %p134, %s12, 1
          %s136 = smul.addr %s135, 4
          %s137 = smul.addr %s136, 4
          %s138 = scalar_lea.vmem %s0, %s137
        $region28: #{tpu_custom_call.1} parent=23 // pred_fallthru
          _
      $region24: #{tpu_custom_call.1} parent=5 // pred_fallthru
        _
      %p139 = scmp.le.s32.totalorder 1, %s12
      %p140 = scmp.lt.s32.totalorder %s12, 3
      %p141 = pnand %p139, %p140
      %p142 = pneg %p141
      // Predicated region
      $region29: #{tpu_custom_call.1} parent=5 // pred_check
        _
      $region30: #{tpu_custom_call.1} parent=5 // pred_check_branch
        %144 = sbr.rel (%p141) target = $region32
      $region31: #{tpu_custom_call.1} parent=5 // pred_region
        %s145 = ssub.s32 %s12, 1
        %p146 = scmp.lt.s32.totalorder %s17, 1
        %s147 = scalar_select %p146, %s17, 1
        %s148 = smul.addr %s147, 4
        %s149 = smul.addr %s148, 4
        %s150 = scalar_lea.vmem %s0, %s149
        %p151 = pneg %p38
        %p152 = pneg %p35
        %p153 = pneg %p59
        %p154 = pneg %p56
        %p155 = pneg %p80
        %p156 = pneg %p77
        %p157 = pneg %p106
        %p158 = pneg %p103
        %s159 = sand.u32 %s93, 1
        %s160 = scalar_lea.sflag [#allocation3], %s159
        %s161 = sand.u32 %s93, 1
        %s162 = scalar_lea.vmem [#allocation2], %s161
        %p163 = scmp.lt.s32.totalorder %s17, 1
        %s164 = scalar_select %p163, %s17, 1
        %s165 = smul.addr %s164, 4
        %s166 = smul.addr %s165, 4
        %s167 = scalar_lea.vmem %s0, %s166
        %v169 = vld [vmem:[%s167] sm:$0xf]
        %v170 = vld [vmem:[%s167 + $0x4] sm:$0xf]
        %v171 = vld [vmem:[%s167 + $0x8] sm:$0xf]
        %v172 = vld [vmem:[%s167 + $0xc] sm:$0xf]
        %v173 = vld [vmem:[%s1] sm:$0xf]
        %v174 = vld [vmem:[%s1 + $0x4] sm:$0xf]
        %v175 = vld [vmem:[%s1 + $0x8] sm:$0xf]
        %v176 = vld [vmem:[%s1 + $0xc] sm:$0xf]
        %v177 = vld [vmem:[%s1 + $0x10] sm:$0xf]
        %v178 = vld [vmem:[%s1 + $0x14] sm:$0xf]
        %v179 = vld [vmem:[%s1 + $0x18] sm:$0xf]
        %v180 = vld [vmem:[%s1 + $0x1c] sm:$0xf]
        %s181 = scalar_lea.vmem %s1, 32
        %v182 = vld [vmem:[%s181] sm:$0xf]
        %v183 = vld [vmem:[%s181 + $0x4] sm:$0xf]
        %v184 = vld [vmem:[%s181 + $0x8] sm:$0xf]
        %v185 = vld [vmem:[%s181 + $0xc] sm:$0xf]
        %v186 = vld [vmem:[%s181 + $0x10] sm:$0xf]
        %v187 = vld [vmem:[%s181 + $0x14] sm:$0xf]
        %v188 = vld [vmem:[%s181 + $0x18] sm:$0xf]
        %v189 = vld [vmem:[%s181 + $0x1c] sm:$0xf]
        %v193 = vunpack.c.l.b16 %v169
        %v194 = vunpack.c.l.b16 %v170
        %v195 = vunpack.c.l.b16 %v171
        %v196 = vpack.c.b16 %v194, %v193
        %v197 = vpack.c.b16 %v195, %v195
        %vm198 = vsmask.f32 7424
        %v200 = vshrl.u32 %v196, 16
        %v202 = vshll.u32 %v196, 16
        %v204 = vrot.slane %v202, 1
        %v205 = vor.u32 %v200, %v204
        %v207 = vshll.u32 %v197, 16
        %v209 = vrot.slane %v207, 1
        %v210 = vsel %vm198, %v205, %v209
        %v219 = vunpack.c.l.b16 %v182
        %v220 = vunpack.c.l.b16 %v183
        %v221 = vunpack.c.l.b16 %v184
        %v222 = vunpack.c.l.b16 %v185
        %v223 = vunpack.c.l.b16 %v186
        %v224 = vunpack.c.l.b16 %v187
        %v225 = vunpack.c.l.b16 %v188
        %v226 = vunpack.c.l.b16 %v189
        %v227 = vpack.c.b16 %v220, %v219
        %v228 = vpack.c.b16 %v222, %v221
        %v229 = vpack.c.b16 %v224, %v223
        %v230 = vpack.c.b16 %v226, %v225
        %vm235 = vcmask 523264
        %v237 = vsel %vm235, %v210, 0
        %239 = vmatpush.bf16.msra.mxu0 0
        %240 = vmatpush.bf16.msra.mxu0 0
        %241 = vmatpush.bf16.msra.mxu0 0
        %242 = vmatpush.bf16.msra.mxu0 0
        %243 = vmatpush.bf16.msra.mxu0 %v230
        %244 = vmatpush.bf16.msra.mxu0 %v229
        %245 = vmatpush.bf16.msra.mxu0 %v228
        %246 = vmatpush.bf16.msra.mxu0 %v227
        %247 = vmatmul.bf16.gmra.mxu0 %v237
        %v248 = vpop.f32.mrf.mxu0
        %v249 = vadd.f32 0.0, %v248
        %v250 = vpop.f32.mrf.mxu0
        %v251 = vadd.f32 0.0, %v250
        %252 = vdwg.mxu0
        %v261 = vunpack.c.l.b16 %v173
        %v262 = vunpack.c.l.b16 %v174
        %v263 = vunpack.c.l.b16 %v175
        %v264 = vunpack.c.l.b16 %v176
        %v265 = vunpack.c.l.b16 %v177
        %v266 = vunpack.c.l.b16 %v178
        %v267 = vunpack.c.l.b16 %v179
        %v268 = vunpack.c.l.b16 %v180
        %v269 = vpack.c.b16 %v262, %v261
        %v270 = vpack.c.b16 %v264, %v263
        %v271 = vpack.c.b16 %v266, %v265
        %v272 = vpack.c.b16 %v268, %v267
        %v277 = vsel %vm235, %v196, 0
        %279 = vmatpush.bf16.msra.mxu0 0
        %280 = vmatpush.bf16.msra.mxu0 0
        %281 = vmatpush.bf16.msra.mxu0 0
        %282 = vmatpush.bf16.msra.mxu0 0
        %283 = vmatpush.bf16.msra.mxu0 %v272
        %284 = vmatpush.bf16.msra.mxu0 %v271
        %285 = vmatpush.bf16.msra.mxu0 %v270
        %286 = vmatpush.bf16.msra.mxu0 %v269
        %287 = vmatmul.bf16.gmra.mxu0 %v277
        %v288 = vpop.f32.mrf.mxu0
        %v289 = vadd.f32 %v249, %v288
        %v290 = vpop.f32.mrf.mxu0
        %v291 = vadd.f32 %v251, %v290
        %292 = vdwg.mxu0
        %s293 = scalar_lea.vmem %s1, 64
        %v294 = vld [vmem:[%s293] sm:$0xf]
        %v295 = vld [vmem:[%s293 + $0x4] sm:$0xf]
        %v296 = vld [vmem:[%s293 + $0x8] sm:$0xf]
        %v297 = vld [vmem:[%s293 + $0xc] sm:$0xf]
        %v298 = vld [vmem:[%s293 + $0x10] sm:$0xf]
        %v299 = vld [vmem:[%s293 + $0x14] sm:$0xf]
        %v300 = vld [vmem:[%s293 + $0x18] sm:$0xf]
        %v301 = vld [vmem:[%s293 + $0x1c] sm:$0xf]
        %vm302 = vcmask 1046528
        %v303 = vrot.slane %v196, 1
        %v304 = vrot.slane %v197, 1
        %v305 = vsel %vm302, %v303, %v304
        %v314 = vunpack.c.l.b16 %v294
        %v315 = vunpack.c.l.b16 %v295
        %v316 = vunpack.c.l.b16 %v296
        %v317 = vunpack.c.l.b16 %v297
        %v318 = vunpack.c.l.b16 %v298
        %v319 = vunpack.c.l.b16 %v299
        %v320 = vunpack.c.l.b16 %v300
        %v321 = vunpack.c.l.b16 %v301
        %v322 = vpack.c.b16 %v315, %v314
        %v323 = vpack.c.b16 %v317, %v316
        %v324 = vpack.c.b16 %v319, %v318
        %v325 = vpack.c.b16 %v321, %v320
        %v331 = vsel %vm235, %v305, 0
        %333 = vmatpush.bf16.msra.mxu0 0
        %334 = vmatpush.bf16.msra.mxu0 0
        %335 = vmatpush.bf16.msra.mxu0 0
        %336 = vmatpush.bf16.msra.mxu0 0
        %337 = vmatpush.bf16.msra.mxu0 %v325
        %338 = vmatpush.bf16.msra.mxu0 %v324
        %339 = vmatpush.bf16.msra.mxu0 %v323
        %340 = vmatpush.bf16.msra.mxu0 %v322
        %341 = vmatmul.bf16.gmra.mxu0 %v331
        %v342 = vpop.f32.mrf.mxu0
        %v343 = vadd.f32 0.0, %v342
        %v344 = vpop.f32.mrf.mxu0
        %v345 = vadd.f32 0.0, %v344
        %346 = vdwg.mxu0
        %v347 = vadd.f32 %v289, %v343
        %v348 = vadd.f32 %v291, %v345
        %s349 = scalar_lea.vmem %s1, 96
        %v350 = vld [vmem:[%s349] sm:$0xf]
        %v351 = vld [vmem:[%s349 + $0x4] sm:$0xf]
        %v352 = vld [vmem:[%s349 + $0x8] sm:$0xf]
        %v353 = vld [vmem:[%s349 + $0xc] sm:$0xf]
        %v354 = vld [vmem:[%s349 + $0x10] sm:$0xf]
        %v355 = vld [vmem:[%s349 + $0x14] sm:$0xf]
        %v356 = vld [vmem:[%s349 + $0x18] sm:$0xf]
        %v357 = vld [vmem:[%s349 + $0x1c] sm:$0xf]
        %vm358 = vsmask.f32 6400
        %v359 = vrot.slane %v200, 1
        %v360 = vrot.slane %v202, 2
        %v361 = vor.u32 %v359, %v360
        %v362 = vshrl.u32 %v197, 16
        %v364 = vrot.slane %v362, 1
        %v365 = vrot.slane %v207, 2
        %v366 = vor.u32 %v364, %v365
        %v367 = vsel %vm358, %v361, %v366
        %v376 = vunpack.c.l.b16 %v350
        %v377 = vunpack.c.l.b16 %v351
        %v378 = vunpack.c.l.b16 %v352
        %v379 = vunpack.c.l.b16 %v353
        %v380 = vunpack.c.l.b16 %v354
        %v381 = vunpack.c.l.b16 %v355
        %v382 = vunpack.c.l.b16 %v356
        %v383 = vunpack.c.l.b16 %v357
        %v384 = vpack.c.b16 %v377, %v376
        %v385 = vpack.c.b16 %v379, %v378
        %v386 = vpack.c.b16 %v381, %v380
        %v387 = vpack.c.b16 %v383, %v382
        %v393 = vsel %vm235, %v367, 0
        %395 = vmatpush.bf16.msra.mxu0 0
        %396 = vmatpush.bf16.msra.mxu0 0
        %397 = vmatpush.bf16.msra.mxu0 0
        %398 = vmatpush.bf16.msra.mxu0 0
        %399 = vmatpush.bf16.msra.mxu0 %v387
        %400 = vmatpush.bf16.msra.mxu0 %v386
        %401 = vmatpush.bf16.msra.mxu0 %v385
        %402 = vmatpush.bf16.msra.mxu0 %v384
        %403 = vmatmul.bf16.gmra.mxu0 %v393
        %v404 = vpop.f32.mrf.mxu0
        %v405 = vadd.f32 0.0, %v404
        %v406 = vpop.f32.mrf.mxu0
        %v407 = vadd.f32 0.0, %v406
        %408 = vdwg.mxu0
        %v409 = vadd.f32 %v347, %v405
        %v410 = vadd.f32 %v348, %v407
        %s411 = scalar_lea.vmem %s1, 128
        %v412 = vld [vmem:[%s411] sm:$0xf]
        %v413 = vld [vmem:[%s411 + $0x4] sm:$0xf]
        %v414 = vld [vmem:[%s411 + $0x8] sm:$0xf]
        %v415 = vld [vmem:[%s411 + $0xc] sm:$0xf]
        %v416 = vld [vmem:[%s411 + $0x10] sm:$0xf]
        %v417 = vld [vmem:[%s411 + $0x14] sm:$0xf]
        %v418 = vld [vmem:[%s411 + $0x18] sm:$0xf]
        %v419 = vld [vmem:[%s411 + $0x1c] sm:$0xf]
        %vm420 = vcmask 1045504
        %v421 = vrot.slane %v196, 2
        %v422 = vrot.slane %v197, 2
        %v423 = vsel %vm420, %v421, %v422
        %v432 = vunpack.c.l.b16 %v412
        %v433 = vunpack.c.l.b16 %v413
        %v434 = vunpack.c.l.b16 %v414
        %v435 = vunpack.c.l.b16 %v415
        %v436 = vunpack.c.l.b16 %v416
        %v437 = vunpack.c.l.b16 %v417
        %v438 = vunpack.c.l.b16 %v418
        %v439 = vunpack.c.l.b16 %v419
        %v440 = vpack.c.b16 %v433, %v432
        %v441 = vpack.c.b16 %v435, %v434
        %v442 = vpack.c.b16 %v437, %v436
        %v443 = vpack.c.b16 %v439, %v438
        %v449 = vsel %vm235, %v423, 0
        %451 = vmatpush.bf16.msra.mxu0 0
        %452 = vmatpush.bf16.msra.mxu0 0
        %453 = vmatpush.bf16.msra.mxu0 0
        %454 = vmatpush.bf16.msra.mxu0 0
        %455 = vmatpush.bf16.msra.mxu0 %v443
        %456 = vmatpush.bf16.msra.mxu0 %v442
        %457 = vmatpush.bf16.msra.mxu0 %v441
        %458 = vmatpush.bf16.msra.mxu0 %v440
        %459 = vmatmul.bf16.gmra.mxu0 %v449
        %v460 = vpop.f32.mrf.mxu0
        %v461 = vadd.f32 0.0, %v460
        %v462 = vpop.f32.mrf.mxu0
        %v463 = vadd.f32 0.0, %v462
        %464 = vdwg.mxu0
        %v465 = vadd.f32 %v409, %v461
        %v466 = vadd.f32 %v410, %v463
        %s467 = scalar_lea.vmem %s1, 160
        %v468 = vld [vmem:[%s467] sm:$0xf]
        %v469 = vld [vmem:[%s467 + $0x4] sm:$0xf]
        %v470 = vld [vmem:[%s467 + $0x8] sm:$0xf]
        %v471 = vld [vmem:[%s467 + $0xc] sm:$0xf]
        %v472 = vld [vmem:[%s467 + $0x10] sm:$0xf]
        %v473 = vld [vmem:[%s467 + $0x14] sm:$0xf]
        %v474 = vld [vmem:[%s467 + $0x18] sm:$0xf]
        %v475 = vld [vmem:[%s467 + $0x1c] sm:$0xf]
        %vm476 = vsmask.f32 5376
        %v477 = vrot.slane %v200, 2
        %v478 = vrot.slane %v202, 3
        %v479 = vor.u32 %v477, %v478
        %v480 = vrot.slane %v362, 2
        %v481 = vrot.slane %v207, 3
        %v482 = vor.u32 %v480, %v481
        %v483 = vsel %vm476, %v479, %v482
        %v492 = vunpack.c.l.b16 %v468
        %v493 = vunpack.c.l.b16 %v469
        %v494 = vunpack.c.l.b16 %v470
        %v495 = vunpack.c.l.b16 %v471
        %v496 = vunpack.c.l.b16 %v472
        %v497 = vunpack.c.l.b16 %v473
        %v498 = vunpack.c.l.b16 %v474
        %v499 = vunpack.c.l.b16 %v475
        %v500 = vpack.c.b16 %v493, %v492
        %v501 = vpack.c.b16 %v495, %v494
        %v502 = vpack.c.b16 %v497, %v496
        %v503 = vpack.c.b16 %v499, %v498
        %v509 = vsel %vm235, %v483, 0
        %511 = vmatpush.bf16.msra.mxu0 0
        %512 = vmatpush.bf16.msra.mxu0 0
        %513 = vmatpush.bf16.msra.mxu0 0
        %514 = vmatpush.bf16.msra.mxu0 0
        %515 = vmatpush.bf16.msra.mxu0 %v503
        %516 = vmatpush.bf16.msra.mxu0 %v502
        %517 = vmatpush.bf16.msra.mxu0 %v501
        %518 = vmatpush.bf16.msra.mxu0 %v500
        %519 = vmatmul.bf16.gmra.mxu0 %v509
        %v520 = vpop.f32.mrf.mxu0
        %v521 = vadd.f32 0.0, %v520
        %v522 = vpop.f32.mrf.mxu0
        %v523 = vadd.f32 0.0, %v522
        %524 = vdwg.mxu0
        %v525 = vadd.f32 %v465, %v521
        %v526 = vadd.f32 %v466, %v523
        %s527 = scalar_lea.vmem %s1, 192
        %v528 = vld [vmem:[%s527] sm:$0xf]
        %v529 = vld [vmem:[%s527 + $0x4] sm:$0xf]
        %v530 = vld [vmem:[%s527 + $0x8] sm:$0xf]
        %v531 = vld [vmem:[%s527 + $0xc] sm:$0xf]
        %v532 = vld [vmem:[%s527 + $0x10] sm:$0xf]
        %v533 = vld [vmem:[%s527 + $0x14] sm:$0xf]
        %v534 = vld [vmem:[%s527 + $0x18] sm:$0xf]
        %v535 = vld [vmem:[%s527 + $0x1c] sm:$0xf]
        %vm536 = vcmask 1044480
        %v537 = vrot.slane %v196, 3
        %v538 = vrot.slane %v197, 3
        %v539 = vsel %vm536, %v537, %v538
        %v548 = vunpack.c.l.b16 %v528
        %v549 = vunpack.c.l.b16 %v529
        %v550 = vunpack.c.l.b16 %v530
        %v551 = vunpack.c.l.b16 %v531
        %v552 = vunpack.c.l.b16 %v532
        %v553 = vunpack.c.l.b16 %v533
        %v554 = vunpack.c.l.b16 %v534
        %v555 = vunpack.c.l.b16 %v535
        %v556 = vpack.c.b16 %v549, %v548
        %v557 = vpack.c.b16 %v551, %v550
        %v558 = vpack.c.b16 %v553, %v552
        %v559 = vpack.c.b16 %v555, %v554
        %v565 = vsel %vm235, %v539, 0
        %567 = vmatpush.bf16.msra.mxu0 0
        %568 = vmatpush.bf16.msra.mxu0 0
        %569 = vmatpush.bf16.msra.mxu0 0
        %570 = vmatpush.bf16.msra.mxu0 0
        %571 = vmatpush.bf16.msra.mxu0 %v559
        %572 = vmatpush.bf16.msra.mxu0 %v558
        %573 = vmatpush.bf16.msra.mxu0 %v557
        %574 = vmatpush.bf16.msra.mxu0 %v556
        %575 = vmatmul.bf16.gmra.mxu0 %v565
        %v576 = vpop.f32.mrf.mxu0
        %v577 = vadd.f32 0.0, %v576
        %v578 = vpop.f32.mrf.mxu0
        %v579 = vadd.f32 0.0, %v578
        %580 = vdwg.mxu0
        %v581 = vadd.f32 %v525, %v577
        %v582 = vadd.f32 %v526, %v579
        %s583 = scalar_lea.vmem %s1, 224
        %v584 = vld [vmem:[%s583] sm:$0xf]
        %v585 = vld [vmem:[%s583 + $0x4] sm:$0xf]
        %v586 = vld [vmem:[%s583 + $0x8] sm:$0xf]
        %v587 = vld [vmem:[%s583 + $0xc] sm:$0xf]
        %v588 = vld [vmem:[%s583 + $0x10] sm:$0xf]
        %v589 = vld [vmem:[%s583 + $0x14] sm:$0xf]
        %v590 = vld [vmem:[%s583 + $0x18] sm:$0xf]
        %v591 = vld [vmem:[%s583 + $0x1c] sm:$0xf]
        %vm592 = vsmask.f32 4352
        %v593 = vrot.slane %v200, 3
        %v594 = vrot.slane %v202, 4
        %v595 = vor.u32 %v593, %v594
        %v596 = vrot.slane %v362, 3
        %v597 = vrot.slane %v207, 4
        %v598 = vor.u32 %v596, %v597
        %v599 = vsel %vm592, %v595, %v598
        %v608 = vunpack.c.l.b16 %v584
        %v609 = vunpack.c.l.b16 %v585
        %v610 = vunpack.c.l.b16 %v586
        %v611 = vunpack.c.l.b16 %v587
        %v612 = vunpack.c.l.b16 %v588
        %v613 = vunpack.c.l.b16 %v589
        %v614 = vunpack.c.l.b16 %v590
        %v615 = vunpack.c.l.b16 %v591
        %v616 = vpack.c.b16 %v609, %v608
        %v617 = vpack.c.b16 %v611, %v610
        %v618 = vpack.c.b16 %v613, %v612
        %v619 = vpack.c.b16 %v615, %v614
        %v625 = vsel %vm235, %v599, 0
        %627 = vmatpush.bf16.msra.mxu0 0
        %628 = vmatpush.bf16.msra.mxu0 0
        %629 = vmatpush.bf16.msra.mxu0 0
        %630 = vmatpush.bf16.msra.mxu0 0
        %631 = vmatpush.bf16.msra.mxu0 %v619
        %632 = vmatpush.bf16.msra.mxu0 %v618
        %633 = vmatpush.bf16.msra.mxu0 %v617
        %634 = vmatpush.bf16.msra.mxu0 %v616
        %635 = vmatmul.bf16.gmra.mxu0 %v625
        %v636 = vpop.f32.mrf.mxu0
        %v637 = vadd.f32 0.0, %v636
        %v638 = vpop.f32.mrf.mxu0
        %v639 = vadd.f32 0.0, %v638
        %640 = vdwg.mxu0
        %v641 = vadd.f32 %v581, %v637
        %v642 = vadd.f32 %v582, %v639
        %s643 = scalar_lea.vmem %s1, 256
        %v644 = vld [vmem:[%s643] sm:$0xf]
        %v645 = vld [vmem:[%s643 + $0x4] sm:$0xf]
        %v646 = vld [vmem:[%s643 + $0x8] sm:$0xf]
        %v647 = vld [vmem:[%s643 + $0xc] sm:$0xf]
        %v648 = vld [vmem:[%s643 + $0x10] sm:$0xf]
        %v649 = vld [vmem:[%s643 + $0x14] sm:$0xf]
        %v650 = vld [vmem:[%s643 + $0x18] sm:$0xf]
        %v651 = vld [vmem:[%s643 + $0x1c] sm:$0xf]
        %v652 = vpack.c.b16 %v195, %v194
        %v661 = vunpack.c.l.b16 %v644
        %v662 = vunpack.c.l.b16 %v645
        %v663 = vunpack.c.l.b16 %v646
        %v664 = vunpack.c.l.b16 %v647
        %v665 = vunpack.c.l.b16 %v648
        %v666 = vunpack.c.l.b16 %v649
        %v667 = vunpack.c.l.b16 %v650
        %v668 = vunpack.c.l.b16 %v651
        %v669 = vpack.c.b16 %v662, %v661
        %v670 = vpack.c.b16 %v664, %v663
        %v671 = vpack.c.b16 %v666, %v665
        %v672 = vpack.c.b16 %v668, %v667
        %v678 = vsel %vm235, %v652, 0
        %680 = vmatpush.bf16.msra.mxu0 0
        %681 = vmatpush.bf16.msra.mxu0 0
        %682 = vmatpush.bf16.msra.mxu0 0
        %683 = vmatpush.bf16.msra.mxu0 0
        %684 = vmatpush.bf16.msra.mxu0 %v672
        %685 = vmatpush.bf16.msra.mxu0 %v671
        %686 = vmatpush.bf16.msra.mxu0 %v670
        %687 = vmatpush.bf16.msra.mxu0 %v669
        %688 = vmatmul.bf16.gmra.mxu0 %v678
        %v689 = vpop.f32.mrf.mxu0
        %v690 = vadd.f32 0.0, %v689
        %v691 = vpop.f32.mrf.mxu0
        %v692 = vadd.f32 0.0, %v691
        %693 = vdwg.mxu0
        %v694 = vadd.f32 %v641, %v690
        %v695 = vadd.f32 %v642, %v692
        %s696 = scalar_lea.vmem %s1, 288
        %v697 = vld [vmem:[%s696] sm:$0xf]
        %v698 = vld [vmem:[%s696 + $0x4] sm:$0xf]
        %v699 = vld [vmem:[%s696 + $0x8] sm:$0xf]
        %v700 = vld [vmem:[%s696 + $0xc] sm:$0xf]
        %v701 = vld [vmem:[%s696 + $0x10] sm:$0xf]
        %v702 = vld [vmem:[%s696 + $0x14] sm:$0xf]
        %v703 = vld [vmem:[%s696 + $0x18] sm:$0xf]
        %v704 = vld [vmem:[%s696 + $0x1c] sm:$0xf]
        %v706 = vunpack.c.l.b16 %v172
        %v707 = vpack.c.b16 %v706, %v706
        %v708 = vshrl.u32 %v652, 16
        %v710 = vshll.u32 %v652, 16
        %v712 = vrot.slane %v710, 1
        %v713 = vor.u32 %v708, %v712
        %v715 = vshll.u32 %v707, 16
        %v717 = vrot.slane %v715, 1
        %v718 = vsel %vm198, %v713, %v717
        %v727 = vunpack.c.l.b16 %v697
        %v728 = vunpack.c.l.b16 %v698
        %v729 = vunpack.c.l.b16 %v699
        %v730 = vunpack.c.l.b16 %v700
        %v731 = vunpack.c.l.b16 %v701
        %v732 = vunpack.c.l.b16 %v702
        %v733 = vunpack.c.l.b16 %v703
        %v734 = vunpack.c.l.b16 %v704
        %v735 = vpack.c.b16 %v728, %v727
        %v736 = vpack.c.b16 %v730, %v729
        %v737 = vpack.c.b16 %v732, %v731
        %v738 = vpack.c.b16 %v734, %v733
        %v744 = vsel %vm235, %v718, 0
        %746 = vmatpush.bf16.msra.mxu0 0
        %747 = vmatpush.bf16.msra.mxu0 0
        %748 = vmatpush.bf16.msra.mxu0 0
        %749 = vmatpush.bf16.msra.mxu0 0
        %750 = vmatpush.bf16.msra.mxu0 %v738
        %751 = vmatpush.bf16.msra.mxu0 %v737
        %752 = vmatpush.bf16.msra.mxu0 %v736
        %753 = vmatpush.bf16.msra.mxu0 %v735
        %754 = vmatmul.bf16.gmra.mxu0 %v744
        %v755 = vpop.f32.mrf.mxu0
        %v756 = vadd.f32 0.0, %v755
        %v757 = vpop.f32.mrf.mxu0
        %v758 = vadd.f32 0.0, %v757
        %759 = vdwg.mxu0
        %v760 = vadd.f32 %v694, %v756
        %v761 = vadd.f32 %v695, %v758
        %s762 = scalar_lea.vmem %s1, 320
        %v763 = vld [vmem:[%s762] sm:$0xf]
        %v764 = vld [vmem:[%s762 + $0x4] sm:$0xf]
        %v765 = vld [vmem:[%s762 + $0x8] sm:$0xf]
        %v766 = vld [vmem:[%s762 + $0xc] sm:$0xf]
        %v767 = vld [vmem:[%s762 + $0x10] sm:$0xf]
        %v768 = vld [vmem:[%s762 + $0x14] sm:$0xf]
        %v769 = vld [vmem:[%s762 + $0x18] sm:$0xf]
        %v770 = vld [vmem:[%s762 + $0x1c] sm:$0xf]
        %v771 = vrot.slane %v652, 1
        %v772 = vrot.slane %v707, 1
        %v773 = vsel %vm302, %v771, %v772
        %v782 = vunpack.c.l.b16 %v763
        %v783 = vunpack.c.l.b16 %v764
        %v784 = vunpack.c.l.b16 %v765
        %v785 = vunpack.c.l.b16 %v766
        %v786 = vunpack.c.l.b16 %v767
        %v787 = vunpack.c.l.b16 %v768
        %v788 = vunpack.c.l.b16 %v769
        %v789 = vunpack.c.l.b16 %v770
        %v790 = vpack.c.b16 %v783, %v782
        %v791 = vpack.c.b16 %v785, %v784
        %v792 = vpack.c.b16 %v787, %v786
        %v793 = vpack.c.b16 %v789, %v788
        %v799 = vsel %vm235, %v773, 0
        %801 = vmatpush.bf16.msra.mxu0 0
        %802 = vmatpush.bf16.msra.mxu0 0
        %803 = vmatpush.bf16.msra.mxu0 0
        %804 = vmatpush.bf16.msra.mxu0 0
        %805 = vmatpush.bf16.msra.mxu0 %v793
        %806 = vmatpush.bf16.msra.mxu0 %v792
        %807 = vmatpush.bf16.msra.mxu0 %v791
        %808 = vmatpush.bf16.msra.mxu0 %v790
        %809 = vmatmul.bf16.gmra.mxu0 %v799
        %v810 = vpop.f32.mrf.mxu0
        %v811 = vadd.f32 0.0, %v810
        %v812 = vpop.f32.mrf.mxu0
        %v813 = vadd.f32 0.0, %v812
        %814 = vdwg.mxu0
        %v815 = vadd.f32 %v760, %v811
        %v816 = vadd.f32 %v761, %v813
        %s817 = scalar_lea.vmem %s1, 352
        %v818 = vld [vmem:[%s817] sm:$0xf]
        %v819 = vld [vmem:[%s817 + $0x4] sm:$0xf]
        %v820 = vld [vmem:[%s817 + $0x8] sm:$0xf]
        %v821 = vld [vmem:[%s817 + $0xc] sm:$0xf]
        %v822 = vld [vmem:[%s817 + $0x10] sm:$0xf]
        %v823 = vld [vmem:[%s817 + $0x14] sm:$0xf]
        %v824 = vld [vmem:[%s817 + $0x18] sm:$0xf]
        %v825 = vld [vmem:[%s817 + $0x1c] sm:$0xf]
        %v826 = vrot.slane %v708, 1
        %v827 = vrot.slane %v710, 2
        %v828 = vor.u32 %v826, %v827
        %v829 = vshrl.u32 %v707, 16
        %v831 = vrot.slane %v829, 1
        %v832 = vrot.slane %v715, 2
        %v833 = vor.u32 %v831, %v832
        %v834 = vsel %vm358, %v828, %v833
        %v843 = vunpack.c.l.b16 %v818
        %v844 = vunpack.c.l.b16 %v819
        %v845 = vunpack.c.l.b16 %v820
        %v846 = vunpack.c.l.b16 %v821
        %v847 = vunpack.c.l.b16 %v822
        %v848 = vunpack.c.l.b16 %v823
        %v849 = vunpack.c.l.b16 %v824
        %v850 = vunpack.c.l.b16 %v825
        %v851 = vpack.c.b16 %v844, %v843
        %v852 = vpack.c.b16 %v846, %v845
        %v853 = vpack.c.b16 %v848, %v847
        %v854 = vpack.c.b16 %v850, %v849
        %v860 = vsel %vm235, %v834, 0
        %862 = vmatpush.bf16.msra.mxu0 0
        %863 = vmatpush.bf16.msra.mxu0 0
        %864 = vmatpush.bf16.msra.mxu0 0
        %865 = vmatpush.bf16.msra.mxu0 0
        %866 = vmatpush.bf16.msra.mxu0 %v854
        %867 = vmatpush.bf16.msra.mxu0 %v853
        %868 = vmatpush.bf16.msra.mxu0 %v852
        %869 = vmatpush.bf16.msra.mxu0 %v851
        %870 = vmatmul.bf16.gmra.mxu0 %v860
        %v871 = vpop.f32.mrf.mxu0
        %v872 = vadd.f32 0.0, %v871
        %v873 = vpop.f32.mrf.mxu0
        %v874 = vadd.f32 0.0, %v873
        %875 = vdwg.mxu0
        %v876 = vadd.f32 %v815, %v872
        %v877 = vadd.f32 %v816, %v874
        %s878 = scalar_lea.vmem %s1, 384
        %v879 = vld [vmem:[%s878] sm:$0xf]
        %v880 = vld [vmem:[%s878 + $0x4] sm:$0xf]
        %v881 = vld [vmem:[%s878 + $0x8] sm:$0xf]
        %v882 = vld [vmem:[%s878 + $0xc] sm:$0xf]
        %v883 = vld [vmem:[%s878 + $0x10] sm:$0xf]
        %v884 = vld [vmem:[%s878 + $0x14] sm:$0xf]
        %v885 = vld [vmem:[%s878 + $0x18] sm:$0xf]
        %v886 = vld [vmem:[%s878 + $0x1c] sm:$0xf]
        %v887 = vrot.slane %v652, 2
        %v888 = vrot.slane %v707, 2
        %v889 = vsel %vm420, %v887, %v888
        %v898 = vunpack.c.l.b16 %v879
        %v899 = vunpack.c.l.b16 %v880
        %v900 = vunpack.c.l.b16 %v881
        %v901 = vunpack.c.l.b16 %v882
        %v902 = vunpack.c.l.b16 %v883
        %v903 = vunpack.c.l.b16 %v884
        %v904 = vunpack.c.l.b16 %v885
        %v905 = vunpack.c.l.b16 %v886
        %v906 = vpack.c.b16 %v899, %v898
        %v907 = vpack.c.b16 %v901, %v900
        %v908 = vpack.c.b16 %v903, %v902
        %v909 = vpack.c.b16 %v905, %v904
        %v915 = vsel %vm235, %v889, 0
        %917 = vmatpush.bf16.msra.mxu0 0
        %918 = vmatpush.bf16.msra.mxu0 0
        %919 = vmatpush.bf16.msra.mxu0 0
        %920 = vmatpush.bf16.msra.mxu0 0
        %921 = vmatpush.bf16.msra.mxu0 %v909
        %922 = vmatpush.bf16.msra.mxu0 %v908
        %923 = vmatpush.bf16.msra.mxu0 %v907
        %924 = vmatpush.bf16.msra.mxu0 %v906
        %925 = vmatmul.bf16.gmra.mxu0 %v915
        %v926 = vpop.f32.mrf.mxu0
        %v927 = vadd.f32 0.0, %v926
        %v928 = vpop.f32.mrf.mxu0
        %v929 = vadd.f32 0.0, %v928
        %930 = vdwg.mxu0
        %v931 = vadd.f32 %v876, %v927
        %v932 = vadd.f32 %v877, %v929
        %s933 = scalar_lea.vmem %s1, 416
        %v934 = vld [vmem:[%s933] sm:$0xf]
        %v935 = vld [vmem:[%s933 + $0x4] sm:$0xf]
        %v936 = vld [vmem:[%s933 + $0x8] sm:$0xf]
        %v937 = vld [vmem:[%s933 + $0xc] sm:$0xf]
        %v938 = vld [vmem:[%s933 + $0x10] sm:$0xf]
        %v939 = vld [vmem:[%s933 + $0x14] sm:$0xf]
        %v940 = vld [vmem:[%s933 + $0x18] sm:$0xf]
        %v941 = vld [vmem:[%s933 + $0x1c] sm:$0xf]
        %v942 = vrot.slane %v708, 2
        %v943 = vrot.slane %v710, 3
        %v944 = vor.u32 %v942, %v943
        %v945 = vrot.slane %v829, 2
        %v946 = vrot.slane %v715, 3
        %v947 = vor.u32 %v945, %v946
        %v948 = vsel %vm476, %v944, %v947
        %v957 = vunpack.c.l.b16 %v934
        %v958 = vunpack.c.l.b16 %v935
        %v959 = vunpack.c.l.b16 %v936
        %v960 = vunpack.c.l.b16 %v937
        %v961 = vunpack.c.l.b16 %v938
        %v962 = vunpack.c.l.b16 %v939
        %v963 = vunpack.c.l.b16 %v940
        %v964 = vunpack.c.l.b16 %v941
        %v965 = vpack.c.b16 %v958, %v957
        %v966 = vpack.c.b16 %v960, %v959
        %v967 = vpack.c.b16 %v962, %v961
        %v968 = vpack.c.b16 %v964, %v963
        %v974 = vsel %vm235, %v948, 0
        %976 = vmatpush.bf16.msra.mxu0 0
        %977 = vmatpush.bf16.msra.mxu0 0
        %978 = vmatpush.bf16.msra.mxu0 0
        %979 = vmatpush.bf16.msra.mxu0 0
        %980 = vmatpush.bf16.msra.mxu0 %v968
        %981 = vmatpush.bf16.msra.mxu0 %v967
        %982 = vmatpush.bf16.msra.mxu0 %v966
        %983 = vmatpush.bf16.msra.mxu0 %v965
        %984 = vmatmul.bf16.gmra.mxu0 %v974
        %v985 = vpop.f32.mrf.mxu0
        %v986 = vadd.f32 0.0, %v985
        %v987 = vpop.f32.mrf.mxu0
        %v988 = vadd.f32 0.0, %v987
        %989 = vdwg.mxu0
        %v990 = vadd.f32 %v931, %v986
        %v991 = vadd.f32 %v932, %v988
        %s992 = scalar_lea.vmem %s1, 448
        %v993 = vld [vmem:[%s992] sm:$0xf]
        %v994 = vld [vmem:[%s992 + $0x4] sm:$0xf]
        %v995 = vld [vmem:[%s992 + $0x8] sm:$0xf]
        %v996 = vld [vmem:[%s992 + $0xc] sm:$0xf]
        %v997 = vld [vmem:[%s992 + $0x10] sm:$0xf]
        %v998 = vld [vmem:[%s992 + $0x14] sm:$0xf]
        %v999 = vld [vmem:[%s992 + $0x18] sm:$0xf]
        %v1000 = vld [vmem:[%s992 + $0x1c] sm:$0xf]
        %v1001 = vrot.slane %v652, 3
        %v1002 = vrot.slane %v707, 3
        %v1003 = vsel %vm536, %v1001, %v1002
        %v1012 = vunpack.c.l.b16 %v993
        %v1013 = vunpack.c.l.b16 %v994
        %v1014 = vunpack.c.l.b16 %v995
        %v1015 = vunpack.c.l.b16 %v996
        %v1016 = vunpack.c.l.b16 %v997
        %v1017 = vunpack.c.l.b16 %v998
        %v1018 = vunpack.c.l.b16 %v999
        %v1019 = vunpack.c.l.b16 %v1000
        %v1020 = vpack.c.b16 %v1013, %v1012
        %v1021 = vpack.c.b16 %v1015, %v1014
        %v1022 = vpack.c.b16 %v1017, %v1016
        %v1023 = vpack.c.b16 %v1019, %v1018
        %v1029 = vsel %vm235, %v1003, 0
        %1031 = vmatpush.bf16.msra.mxu0 0
        %1032 = vmatpush.bf16.msra.mxu0 0
        %1033 = vmatpush.bf16.msra.mxu0 0
        %1034 = vmatpush.bf16.msra.mxu0 0
        %1035 = vmatpush.bf16.msra.mxu0 %v1023
        %1036 = vmatpush.bf16.msra.mxu0 %v1022
        %1037 = vmatpush.bf16.msra.mxu0 %v1021
        %1038 = vmatpush.bf16.msra.mxu0 %v1020
        %1039 = vmatmul.bf16.gmra.mxu0 %v1029
        %v1040 = vpop.f32.mrf.mxu0
        %v1041 = vadd.f32 0.0, %v1040
        %v1042 = vpop.f32.mrf.mxu0
        %v1043 = vadd.f32 0.0, %v1042
        %1044 = vdwg.mxu0
        %v1045 = vadd.f32 %v990, %v1041
        %v1046 = vadd.f32 %v991, %v1043
        %s1047 = scalar_lea.vmem %s1, 480
        %v1048 = vld [vmem:[%s1047] sm:$0xf]
        %v1049 = vld [vmem:[%s1047 + $0x4] sm:$0xf]
        %v1050 = vld [vmem:[%s1047 + $0x8] sm:$0xf]
        %v1051 = vld [vmem:[%s1047 + $0xc] sm:$0xf]
        %v1052 = vld [vmem:[%s1047 + $0x10] sm:$0xf]
        %v1053 = vld [vmem:[%s1047 + $0x14] sm:$0xf]
        %v1054 = vld [vmem:[%s1047 + $0x18] sm:$0xf]
        %v1055 = vld [vmem:[%s1047 + $0x1c] sm:$0xf]
        %v1056 = vrot.slane %v708, 3
        %v1057 = vrot.slane %v710, 4
        %v1058 = vor.u32 %v1056, %v1057
        %v1059 = vrot.slane %v829, 3
        %v1060 = vrot.slane %v715, 4
        %v1061 = vor.u32 %v1059, %v1060
        %v1062 = vsel %vm592, %v1058, %v1061
        %v1071 = vunpack.c.l.b16 %v1048
        %v1072 = vunpack.c.l.b16 %v1049
        %v1073 = vunpack.c.l.b16 %v1050
        %v1074 = vunpack.c.l.b16 %v1051
        %v1075 = vunpack.c.l.b16 %v1052
        %v1076 = vunpack.c.l.b16 %v1053
        %v1077 = vunpack.c.l.b16 %v1054
        %v1078 = vunpack.c.l.b16 %v1055
        %v1079 = vpack.c.b16 %v1072, %v1071
        %v1080 = vpack.c.b16 %v1074, %v1073
        %v1081 = vpack.c.b16 %v1076, %v1075
        %v1082 = vpack.c.b16 %v1078, %v1077
        %v1088 = vsel %vm235, %v1062, 0
        %1090 = vmatpush.bf16.msra.mxu0 0
        %1091 = vmatpush.bf16.msra.mxu0 0
        %1092 = vmatpush.bf16.msra.mxu0 0
        %1093 = vmatpush.bf16.msra.mxu0 0
        %1094 = vmatpush.bf16.msra.mxu0 %v1082
        %1095 = vmatpush.bf16.msra.mxu0 %v1081
        %1096 = vmatpush.bf16.msra.mxu0 %v1080
        %1097 = vmatpush.bf16.msra.mxu0 %v1079
        %1098 = vmatmul.bf16.gmra.mxu0 %v1088
        %v1099 = vpop.f32.mrf.mxu0
        %v1100 = vadd.f32 0.0, %v1099
        %v1101 = vpop.f32.mrf.mxu0
        %v1102 = vadd.f32 0.0, %v1101
        %1103 = vdwg.mxu0
        %v1104 = vadd.f32 %v1045, %v1100
        %v1105 = vadd.f32 %v1046, %v1102
        %s1106 = scalar_lea.vmem %s1, 512
        %v1107 = vld [vmem:[%s1106] sm:$0xf]
        %v1108 = vld [vmem:[%s1106 + $0x4] sm:$0xf]
        %v1109 = vld [vmem:[%s1106 + $0x8] sm:$0xf]
        %v1110 = vld [vmem:[%s1106 + $0xc] sm:$0xf]
        %v1111 = vld [vmem:[%s1106 + $0x10] sm:$0xf]
        %v1112 = vld [vmem:[%s1106 + $0x14] sm:$0xf]
        %v1113 = vld [vmem:[%s1106 + $0x18] sm:$0xf]
        %v1114 = vld [vmem:[%s1106 + $0x1c] sm:$0xf]
        %v1115 = vpack.c.b16 %v706, %v195
        %v1124 = vunpack.c.l.b16 %v1107
        %v1125 = vunpack.c.l.b16 %v1108
        %v1126 = vunpack.c.l.b16 %v1109
        %v1127 = vunpack.c.l.b16 %v1110
        %v1128 = vunpack.c.l.b16 %v1111
        %v1129 = vunpack.c.l.b16 %v1112
        %v1130 = vunpack.c.l.b16 %v1113
        %v1131 = vunpack.c.l.b16 %v1114
        %v1132 = vpack.c.b16 %v1125, %v1124
        %v1133 = vpack.c.b16 %v1127, %v1126
        %v1134 = vpack.c.b16 %v1129, %v1128
        %v1135 = vpack.c.b16 %v1131, %v1130
        %v1141 = vsel %vm235, %v1115, 0
        %1143 = vmatpush.bf16.msra.mxu0 0
        %1144 = vmatpush.bf16.msra.mxu0 0
        %1145 = vmatpush.bf16.msra.mxu0 0
        %1146 = vmatpush.bf16.msra.mxu0 0
        %1147 = vmatpush.bf16.msra.mxu0 %v1135
        %1148 = vmatpush.bf16.msra.mxu0 %v1134
        %1149 = vmatpush.bf16.msra.mxu0 %v1133
        %1150 = vmatpush.bf16.msra.mxu0 %v1132
        %1151 = vmatmul.bf16.gmra.mxu0 %v1141
        %v1152 = vpop.f32.mrf.mxu0
        %v1153 = vadd.f32 0.0, %v1152
        %v1154 = vpop.f32.mrf.mxu0
        %v1155 = vadd.f32 0.0, %v1154
        %1156 = vdwg.mxu0
        %v1157 = vadd.f32 %v1104, %v1153
        %v1158 = vadd.f32 %v1105, %v1155
        %v1159 = vld [vmem:[%s2] sm:$0x1]
        %v1160 = vperm.slane %v1159, 0
        %v1161 = vadd.f32 %v1157, %v1160
        %v1162 = vadd.f32 %v1158, %v1160
        %v1163 = vmax.f32 %v1161, 0.0
        %v1164 = vmax.f32 %v1162, 0.0
        %vm1165 = vcmask 39936
        %v1166 = vsel %vm1165, %v1163, 0.0
        %v1167 = vsel %vm1165, %v1164, 0.0
        %v1168 = vadd.f32 %v1166, %v1167
        %v1169 = vrot.slane %v1168, 4
        %v1170 = vadd.f32 %v1168, %v1169
        %v1171 = vrot.slane %v1170, 2
        %v1172 = vadd.f32 %v1170, %v1171
        %v1173 = vrot.slane %v1172, 1
        %v1174 = vadd.f32 %v1172, %v1173
        %v1175 = vrcp.pop 16.0
        %v1176 = vmul.f32 16.0, %v1175
        %v1177 = vsub.f32 1.0, %v1176
        %v1178 = vmul.f32 %v1175, %v1177
        %v1179 = vadd.f32 %v1175, %v1178
        %vm1180 = vweird.f32 %v1175
        %v1181 = vsel %vm1180, %v1175, %v1179
        %v1182 = vmul.f32 %v1174, %v1181
        %v1183 = vld [vmem:[%s2 + $0x1] sm:$0x1f]
        %v1184 = vld [vmem:[%s2 + $0x6] sm:$0x1]
        %v1186 = vsel %vm1165, %v1182, 0
        %vm1188 = vcmask 1044480
        %v1190 = vsel %vm1188, %v1183, 0
        %1192 = vmatpush.msra.mxu0 0.0
        %1193 = vmatpush.msra.mxu0 0.0
        %1194 = vmatpush.msra.mxu0 0.0
        %1195 = vmatpush.msra.mxu0 0.0
        %1196 = vmatpush.msra.mxu0 0.0
        %1197 = vmatpush.msra.mxu0 0.0
        %1198 = vmatpush.msra.mxu0 0.0
        %1199 = vmatpush.msra.mxu0 0.0
        %1200 = vmatpush.msra.mxu0 0.0
        %1201 = vmatpush.msra.mxu0 0.0
        %1202 = vmatpush.msra.mxu0 0.0
        %1203 = vmatpush.msra.mxu0 0.0
        %1204 = vmatpush.msra.mxu0 0.0
        %1205 = vmatpush.msra.mxu0 0.0
        %1206 = vmatpush.msra.mxu0 0.0
        %1207 = vmatpush.msra.mxu0 %v1190
        %1208 = vmatmul.f32.gmra.mxu0 %v1186
        %v1209 = vpop.f32.mrf.mxu0
        %v1210 = vadd.f32 %v1184, %v1209
        %1211 = vdwg.mxu0
        %v1212 = vsub.f32 0.0, %v1210
        %v1213 = vmul.f32 %v1212, 1.442695
        %v1214 = vpow.pop %v1213
        %v1215 = vadd.f32 %v1214, 1.0
        %v1216 = vrcp.pop %v1215
        %v1217 = vld [vmem:[%s2 + $0x7] sm:$0x1f]
        %v1218 = vld [vmem:[%s2 + $0xc] sm:$0x1]
        %v1220 = vsel %vm1165, %v1216, 0
        %v1223 = vsel %vm1188, %v1217, 0
        %1225 = vmatpush.msra.mxu0 0.0
        %1226 = vmatpush.msra.mxu0 0.0
        %1227 = vmatpush.msra.mxu0 0.0
        %1228 = vmatpush.msra.mxu0 0.0
        %1229 = vmatpush.msra.mxu0 0.0
        %1230 = vmatpush.msra.mxu0 0.0
        %1231 = vmatpush.msra.mxu0 0.0
        %1232 = vmatpush.msra.mxu0 0.0
        %1233 = vmatpush.msra.mxu0 0.0
        %1234 = vmatpush.msra.mxu0 0.0
        %1235 = vmatpush.msra.mxu0 0.0
        %1236 = vmatpush.msra.mxu0 0.0
        %1237 = vmatpush.msra.mxu0 0.0
        %1238 = vmatpush.msra.mxu0 0.0
        %1239 = vmatpush.msra.mxu0 0.0
        %1240 = vmatpush.msra.mxu0 %v1223
        %1241 = vmatmul.f32.gmra.mxu0 %v1220
        %v1242 = vpop.f32.mrf.mxu0
        %v1243 = vadd.f32 %v1218, %v1242
        %1244 = vdwg.mxu0
        %vm1245 = vcmask 8192
        %1246 = vst.msk [vmem:[%s162] sm:$0x1] %vm1245, %v1243
        %s1247 = sand.u32 %s93, 1
        %s1248 = scalar_lea.sflag [#allocation3], %s1247
        %s1249 = sand.u32 %s93, 1
        %s1250 = scalar_lea.vmem [#allocation2], %s1249
        // Predicated region
        $region33: #{tpu_custom_call.1} parent=31 // pred_check
          %p1251 = pneg %p103
        $region34: #{tpu_custom_call.1} parent=31 // pred_check_branch
          %1253 = sbr.rel (%p1251) target = $region36
        $region35: #{tpu_custom_call.1} parent=31 // pred_region
          %1255 = vsyncadd %s1248, 0
          %s1256 = scalar_lea.hbm %s3, %s17
          %s1258 = sshll.u32 %s1250, 4
          %s1259 = int_to_ptr.vmem [resolvable:$true] %s1258
          %s1260 = sshll.u32 %s1256, 4
          %s1261 = int_to_ptr.hbm [resolvable:$true] %s1260
          %1263 = dma.vmem_to_hbm [thread:$0]  %s1259, 16, %s1261, %s1248
        $region36: #{tpu_custom_call.1} parent=31 // pred_fallthru
          _
      $region32: #{tpu_custom_call.1} parent=5 // pred_fallthru
        _
      %p1264 = scmp.le.s32.totalorder 2, %s12
      // Predicated region
      $region37: #{tpu_custom_call.1} parent=5 // pred_check
        %p1265 = pneg %p1264
      $region38: #{tpu_custom_call.1} parent=5 // pred_check_branch
        %1267 = sbr.rel (%p1265) target = $region40
      $region39: #{tpu_custom_call.1} parent=5 // pred_region
        %s1268 = ssub.s32 %s12, 2
        // Predicated region
        $region41: #{tpu_custom_call.1} parent=39 // pred_check
          %p1269 = pneg %p109
        $region42: #{tpu_custom_call.1} parent=39 // pred_check_branch
          %1271 = sbr.rel (%p1269) target = $region44
        $region43: #{tpu_custom_call.1} parent=39 // pred_region
          %s1272 = sand.u32 %s94, 1
          %s1273 = scalar_lea.sflag [#allocation3], %s1272
          %s1274 = sand.u32 %s94, 1
          %s1275 = scalar_lea.vmem [#allocation2], %s1274
          %1277 = dma.done %s1273, 16
        $region44: #{tpu_custom_call.1} parent=39 // pred_fallthru
          _
      $region40: #{tpu_custom_call.1} parent=5 // pred_fallthru
        _
    $region6: #{tpu_custom_call.1} parent=1 // loop_footer
      %s16 = sadd.s32 1, %s12
    $region7: #{tpu_custom_call.1} parent=1 // loop_footer_branch
      %11 = sbr.rel target = $region3
    $region8: #{tpu_custom_call.1} parent=1 // loop_exit
      _
    %1278 = vsyncpa [#allocation3], 1
    %s1279 = scalar_lea.sflag [#allocation3], 1
    %1280 = vsyncpa %s1279, 1

</llo_original>
